<compile_context>
chip_gen: v5e
topology: v5e:2x2
jax: 0.10.0
libtpu: 0.0.40
codegen_flags: <defaults>
</compile_context>

<pallas_src>
import math
import functools

import jax
import jax.numpy as jnp
from jax.experimental import pallas as pl
from jax.experimental.pallas import tpu as pltpu

LANE = 128       # lane width / feature padding
BIAS_ROWS = 8    # bias slab padded to one (8,128) tile
H1 = 20          # per-network hidden 1 (module spec)
H2 = 10          # per-network hidden 2 (module spec)


# ----------------------------------------------------------------------------- kernel
def _gac_kernel(action_size, x_ref, w_ref, b_ref, out_ref):
    """Fused actor+critic forward on one (block_m, 128) tile of states.

    x_ref  : (block_m, 128)  row r = [global_state | partial_state | 0-pad] of state r
    w_ref  : (3, 128, 128)   block-diagonal W1/W2/W3 (zero padded)
    b_ref  : (8, 128)        rows 0..2 = b1/b2/b3 (zero padded)
    out_ref: (block_m, 128)  lanes [0,A)=policy, lane A=value, lane A+1=-entropy
    """
    x = x_ref[...]

    h = jnp.dot(x, w_ref[0], preferred_element_type=jnp.float32) + b_ref[0:1, :]
    h = jnp.maximum(h, 0.0)
    h = jnp.dot(h, w_ref[1], preferred_element_type=jnp.float32) + b_ref[1:2, :]
    h = jnp.maximum(h, 0.0)
    z = jnp.dot(h, w_ref[2], preferred_element_type=jnp.float32) + b_ref[2:3, :]
    # z: lanes [0, A) = actor logits, lane A = critic value, rest = 0

    lane = jax.lax.broadcasted_iota(jnp.int32, z.shape, dimension=1)
    is_logit = lane < action_size

    # masked softmax over the actor logits (padded lanes -> prob 0)
    masked = jnp.where(is_logit, z, -jnp.inf)
    m = jnp.max(masked, axis=-1, keepdims=True)
    e = jnp.exp(masked - m)
    inv_sum = pl.reciprocal(jnp.sum(e, axis=-1, keepdims=True), approx=False)
    probs = e * inv_sum

    # forward() returns -entropy = sum(p * log(p + 1e-8))  (keep the 1e-8 artifact)
    negent = jnp.sum(probs * jnp.log(probs + 1e-8), axis=-1, keepdims=True)

    # pull the value out of lane A
    value = jnp.sum(jnp.where(lane == action_size, z, 0.0), axis=-1, keepdims=True)

    out_ref[...] = jnp.where(
        is_logit, probs,
        jnp.where(lane == action_size, value,
                  jnp.where(lane == action_size + 1, negent, 0.0)))


# ----------------------------------------------------------------------------- params
def _init_linear(key, in_dim, out_dim):
    # xavier_uniform_ on the PyTorch (out,in) weight; stored transposed (in,out); zero bias
    limit = math.sqrt(6.0 / (in_dim + out_dim))
    w = jax.random.uniform(key, (in_dim, out_dim), jnp.float32, -limit, limit)
    b = jnp.zeros((out_dim,), jnp.float32)
    return w, b


def init_global_actor_critic_params(key, actor_input_size, critic_input_size, action_size):
    ks = jax.random.split(key, 6)
    w1c, b1c = _init_linear(ks[0], critic_input_size, H1)
    w2c, b2c = _init_linear(ks[1], H1, H2)
    w3c, b3c = _init_linear(ks[2], H2, 1)
    w1a, b1a = _init_linear(ks[3], actor_input_size, H1)
    w2a, b2a = _init_linear(ks[4], H1, H2)
    w3a, b3a = _init_linear(ks[5], H2, action_size)
    return dict(w1c=w1c, b1c=b1c, w2c=w2c, b2c=b2c, w3c=w3c, b3c=b3c,
                w1a=w1a, b1a=b1a, w2a=w2a, b2a=b2a, w3a=w3a, b3a=b3a)


def pack_gac_params(params, actor_input_size, critic_input_size, action_size):
    """One-time packing of all 12 parameters into (3,128,128) weights + (8,128) biases."""
    C, Ain, A = critic_input_size, actor_input_size, action_size
    assert C + Ain <= LANE, "concatenated state must fit one 128-lane tile"
    assert 1 <= A and A + 2 <= LANE, "action_size + value + entropy must fit one tile"

    w1 = jnp.zeros((LANE, LANE), jnp.float32)
    w1 = w1.at[:C, :H1].set(params["w1c"])                      # critic block
    w1 = w1.at[C:C + Ain, H1:2 * H1].set(params["w1a"])         # actor block

    w2 = jnp.zeros((LANE, LANE), jnp.float32)
    w2 = w2.at[:H1, :H2].set(params["w2c"])
    w2 = w2.at[H1:2 * H1, H2:2 * H2].set(params["w2a"])

    w3 = jnp.zeros((LANE, LANE), jnp.float32)
    w3 = w3.at[H2:2 * H2, :A].set(params["w3a"])                # logits -> lanes [0,A)
    w3 = w3.at[:H2, A].set(params["w3c"][:, 0])                 # value  -> lane A

    w_slab = jnp.stack([w1, w2, w3])                            # (3, 128, 128)

    b = jnp.zeros((BIAS_ROWS, LANE), jnp.float32)
    b = b.at[0, :H1].set(params["b1c"]).at[0, H1:2 * H1].set(params["b1a"])
    b = b.at[1, :H2].set(params["b2c"]).at[1, H2:2 * H2].set(params["b2a"])
    b = b.at[2, :A].set(params["b3a"]).at[2, A].set(params["b3c"][0])
    return w_slab, b


# ----------------------------------------------------------------------------- forward
def make_gac_forward(actor_input_size, critic_input_size, action_size, batch_block=128):
    C, Ain, A = critic_input_size, actor_input_size, action_size
    kernel = functools.partial(_gac_kernel, A)

    def _call(x_padded, w_slab, b_slab, block_m):
        num_tiles = x_padded.shape[0] // block_m
        return pl.pallas_call(
            kernel,
            out_shape=jax.ShapeDtypeStruct(x_padded.shape, jnp.float32),
            grid=(num_tiles,),
            in_specs=[
                pl.BlockSpec((block_m, LANE), lambda i: (i, 0)),        # states tile
                pl.BlockSpec((3, LANE, LANE), lambda i: (0, 0, 0)),     # resident weights
                pl.BlockSpec((BIAS_ROWS, LANE), lambda i: (0, 0)),      # resident biases
            ],
            out_specs=pl.BlockSpec((block_m, LANE), lambda i: (i, 0)),
            compiler_params=pltpu.CompilerParams(
                dimension_semantics=("parallel",)),
        )(x_padded, w_slab, b_slab)

    @jax.jit
    def single_forward(gs, ps, w_slab, b_slab):
        # one logical state in an 8-row tile (module semantics)
        x = jnp.zeros((8, LANE), jnp.float32)
        x = x.at[0, :C].set(gs).at[0, C:C + Ain].set(ps)
        out = _call(x, w_slab, b_slab, 8)
        return out[0, :A], out[0, A:A + 1], out[0, A + 1]

    @jax.jit
    def batched_forward(gs_batch, ps_batch, w_slab, b_slab):
        # rows = states; grid over the batch axis (the main perf lever)
        M = gs_batch.shape[0]
        m_pad = ((M + batch_block - 1) // batch_block) * batch_block
        x = jnp.zeros((m_pad, LANE), jnp.float32)
        x = x.at[:M, :C].set(gs_batch).at[:M, C:C + Ain].set(ps_batch)
        out = _call(x, w_slab, b_slab, batch_block)
        return out[:M, :A], out[:M, A], out[:M, A + 1]

    return single_forward, batched_forward


def global_actor_critic_forward(global_obs, partial_obs, w_slab, b_slab, single_forward):
    # flatten list-of-lists exactly like the PyTorch forward; heavy work is inside jit
    flat_global = [float(i) for obv in global_obs for i in obv]
    gs = jnp.asarray(flat_global, jnp.float32)
    ps = jnp.asarray(partial_obs, jnp.float32)
    return single_forward(gs, ps, w_slab, b_slab)


# ----------------------------------------------------------------------------- reference
def _reference_forward(gs, ps, params):
    def mlp(x, w1, b1, w2, b2, w3, b3):
        h = jnp.maximum(x @ w1 + b1, 0.0)
        h = jnp.maximum(h @ w2 + b2, 0.0)
        return h @ w3 + b3

    value = mlp(gs, params["w1c"], params["b1c"], params["w2c"], params["b2c"],
                params["w3c"], params["b3c"])
    logits = mlp(ps, params["w1a"], params["b1a"], params["w2a"], params["b2a"],
                 params["w3a"], params["b3a"])
    probs = jax.nn.softmax(logits, axis=-1)
    neg_entropy = jnp.sum(probs * jnp.log(probs + 1e-8), axis=-1)
    return probs, value, neg_entropy


# ----------------------------------------------------------------------------- main
if __name__ == "__main__":
    actor_input_size = 16
    critic_input_size = 32
    action_size = 5

    key = jax.random.PRNGKey(0)
    k_params, k_bias, k_gobs, k_pobs, k_bg, k_bp = jax.random.split(key, 6)

    params = init_global_actor_critic_params(
        k_params, actor_input_size, critic_input_size, action_size)
    w_slab, b_slab = pack_gac_params(
        params, actor_input_size, critic_input_size, action_size)
    single_fwd, batched_fwd = make_gac_forward(
        actor_input_size, critic_input_size, action_size, batch_block=128)

    # ---- single-state forward with module semantics (list-of-lists obs) ----
    gobs_arr = jax.random.normal(k_gobs, (4, 8), jnp.float32)       # 4 agents x 8 feats = 32
    global_obs = [[float(v) for v in row] for row in gobs_arr]
    pobs_arr = jax.random.normal(k_pobs, (actor_input_size,), jnp.float32)
    partial_obs = [float(v) for v in pobs_arr]

    policy, value, neg_entropy = global_actor_critic_forward(
        global_obs, partial_obs, w_slab, b_slab, single_fwd)
    jax.block_until_ready((policy, value, neg_entropy))

    gs = jnp.asarray([i for obv in global_obs for i in obv], jnp.float32)
    ps = jnp.asarray(partial_obs, jnp.float32)
    p_ref, v_ref, ne_ref = _reference_forward(gs, ps, params)
    assert jnp.allclose(policy, p_ref, atol=1e-5), (policy, p_ref)
    assert jnp.allclose(value, v_ref, atol=1e-5), (value, v_ref)
    assert jnp.allclose(neg_entropy, ne_ref, atol=1e-5), (neg_entropy, ne_ref)

    # ---- stronger packing check: nonzero biases ----
    bkeys = jax.random.split(k_bias, 6)
    params_nz = dict(params)
    for i, name in enumerate(["b1c", "b2c", "b3c", "b1a", "b2a", "b3a"]):
        params_nz[name] = 0.1 * jax.random.normal(bkeys[i], params[name].shape, jnp.float32)
    w_nz, b_nz = pack_gac_params(params_nz, actor_input_size, critic_input_size, action_size)
    p2, v2, ne2 = single_fwd(gs, ps, w_nz, b_nz)
    p2r, v2r, ne2r = _reference_forward(gs, ps, params_nz)
    assert jnp.allclose(p2, p2r, atol=1e-5)
    assert jnp.allclose(v2, v2r, atol=1e-5)
    assert jnp.allclose(ne2, ne2r, atol=1e-5)

    # ---- batched forward (the perf-relevant path): 256 states, grid over batch ----
    M = 256
    gs_b = jax.random.normal(k_bg, (M, critic_input_size), jnp.float32)
    ps_b = jax.random.normal(k_bp, (M, actor_input_size), jnp.float32)
    pol_b, val_b, ne_b = batched_fwd(gs_b, ps_b, w_slab, b_slab)
    jax.block_until_ready((pol_b, val_b, ne_b))

    pr_b, vr_b, ner_b = jax.vmap(lambda g, p: _reference_forward(g, p, params))(gs_b, ps_b)
    assert jnp.allclose(pol_b, pr_b, atol=1e-5)
    assert jnp.allclose(val_b, vr_b[:, 0], atol=1e-5)
    assert jnp.allclose(ne_b, ner_b, atol=1e-5)

    print("KERNEL_OK")
</pallas_src>

<mosaic_0001>
module attributes {stable_mosaic.version = 11 : i64} {
  func.func @_gac_kernel(%arg0: i32, %arg1: memref<8x128xf32, #tpu.memory_space<vmem>>, %arg2: memref<3x128x128xf32, #tpu.memory_space<vmem>>, %arg3: memref<8x128xf32, #tpu.memory_space<vmem>>, %arg4: memref<8x128xf32, #tpu.memory_space<vmem>>) attributes {dimension_semantics = [#tpu.dimension_semantics<parallel>], iteration_bounds = array<i64: 1>, scalar_prefetch = 0 : i64, scratch_operands = 0 : i64, tpu.core_type = #tpu.core_type<tc>, window_params = [{transform_indices = @transform_0, window_bounds = array<i64: 8, 128>}, {pipeline_mode = #tpu.pipeline_mode<synchronous>, transform_indices = @transform_1, window_bounds = array<i64: 3, 128, 128>}, {pipeline_mode = #tpu.pipeline_mode<synchronous>, transform_indices = @transform_2, window_bounds = array<i64: 8, 128>}, {transform_indices = @transform_3, window_bounds = array<i64: 8, 128>}]} {
    %c0 = arith.constant 0 : index
    %c0_0 = arith.constant 0 : index
    %0 = vector.load %arg1[%c0, %c0_0] : memref<8x128xf32, #tpu.memory_space<vmem>>, vector<8x128xf32>
    %c0_1 = arith.constant 0 : index
    %c0_2 = arith.constant 0 : index
    %c0_3 = arith.constant 0 : index
    %1 = vector.load %arg2[%c0_1, %c0_2, %c0_3] : memref<3x128x128xf32, #tpu.memory_space<vmem>>, vector<1x128x128xf32>
    %2 = vector.shape_cast %1 : vector<1x128x128xf32> to vector<128x128xf32>
    %cst = arith.constant dense<0.000000e+00> : vector<8x128xf32>
    %3 = tpu.matmul %0, %2, %cst {dimension_numbers = #tpu.dot_dimension_numbers<[1], [0], [0], [1], [0, 0, 1, 1], [], []>} : vector<8x128xf32>, vector<128x128xf32>, vector<8x128xf32> -> vector<8x128xf32>
    %c0_4 = arith.constant 0 : index
    %c0_5 = arith.constant 0 : index
    %4 = vector.load %arg3[%c0_4, %c0_5] : memref<8x128xf32, #tpu.memory_space<vmem>>, vector<1x128xf32>
    %5 = vector.broadcast %4 : vector<1x128xf32> to vector<8x128xf32>
    %6 = arith.addf %3, %5 : vector<8x128xf32>
    %cst_6 = arith.constant 0.000000e+00 : f32
    %7 = vector.broadcast %cst_6 : f32 to vector<8x128xf32>
    %8 = arith.maximumf %6, %7 : vector<8x128xf32>
    %c1 = arith.constant 1 : index
    %c0_7 = arith.constant 0 : index
    %c0_8 = arith.constant 0 : index
    %9 = vector.load %arg2[%c1, %c0_7, %c0_8] : memref<3x128x128xf32, #tpu.memory_space<vmem>>, vector<1x128x128xf32>
    %10 = vector.shape_cast %9 : vector<1x128x128xf32> to vector<128x128xf32>
    %cst_9 = arith.constant dense<0.000000e+00> : vector<8x128xf32>
    %11 = tpu.matmul %8, %10, %cst_9 {dimension_numbers = #tpu.dot_dimension_numbers<[1], [0], [0], [1], [0, 0, 1, 1], [], []>} : vector<8x128xf32>, vector<128x128xf32>, vector<8x128xf32> -> vector<8x128xf32>
    %c1_10 = arith.constant 1 : index
    %c0_11 = arith.constant 0 : index
    %12 = vector.load %arg3[%c1_10, %c0_11] : memref<8x128xf32, #tpu.memory_space<vmem>>, vector<1x128xf32>
    %13 = vector.broadcast %12 : vector<1x128xf32> to vector<8x128xf32>
    %14 = arith.addf %11, %13 : vector<8x128xf32>
    %cst_12 = arith.constant 0.000000e+00 : f32
    %15 = vector.broadcast %cst_12 : f32 to vector<8x128xf32>
    %16 = arith.maximumf %14, %15 : vector<8x128xf32>
    %c2 = arith.constant 2 : index
    %c0_13 = arith.constant 0 : index
    %c0_14 = arith.constant 0 : index
    %17 = vector.load %arg2[%c2, %c0_13, %c0_14] : memref<3x128x128xf32, #tpu.memory_space<vmem>>, vector<1x128x128xf32>
    %18 = vector.shape_cast %17 : vector<1x128x128xf32> to vector<128x128xf32>
    %cst_15 = arith.constant dense<0.000000e+00> : vector<8x128xf32>
    %19 = tpu.matmul %16, %18, %cst_15 {dimension_numbers = #tpu.dot_dimension_numbers<[1], [0], [0], [1], [0, 0, 1, 1], [], []>} : vector<8x128xf32>, vector<128x128xf32>, vector<8x128xf32> -> vector<8x128xf32>
    %c2_16 = arith.constant 2 : index
    %c0_17 = arith.constant 0 : index
    %20 = vector.load %arg3[%c2_16, %c0_17] : memref<8x128xf32, #tpu.memory_space<vmem>>, vector<1x128xf32>
    %21 = vector.broadcast %20 : vector<1x128xf32> to vector<8x128xf32>
    %22 = arith.addf %19, %21 : vector<8x128xf32>
    %23 = tpu.iota {dimensions = array<i32: 1>} : vector<8x128xi32>
    %c5_i32 = arith.constant 5 : i32
    %24 = vector.broadcast %c5_i32 : i32 to vector<8x128xi32>
    %25 = arith.cmpi slt, %23, %24 : vector<8x128xi32>
    %cst_18 = arith.constant 0xFF800000 : f32
    %26 = vector.broadcast %cst_18 : f32 to vector<8x128xf32>
    %27 = arith.select %25, %22, %26 : vector<8x128xi1>, vector<8x128xf32>
    %cst_19 = arith.constant dense<0xFF800000> : vector<8xf32>
    %28 = vector.multi_reduction <maximumf>, %27, %cst_19 [1] : vector<8x128xf32> to vector<8xf32>
    %29 = vector.shape_cast %28 : vector<8xf32> to vector<8x1xf32>
    %30 = vector.broadcast %29 : vector<8x1xf32> to vector<8x128xf32>
    %31 = arith.subf %27, %30 : vector<8x128xf32>
    %32 = math.exp %31 : vector<8x128xf32>
    %cst_20 = arith.constant dense<0.000000e+00> : vector<8xf32>
    %33 = vector.multi_reduction <add>, %32, %cst_20 [1] : vector<8x128xf32> to vector<8xf32>
    %34 = vector.shape_cast %33 : vector<8xf32> to vector<8x1xf32>
    %35 = tpu.reciprocal %34 : vector<8x1xf32> -> vector<8x1xf32>
    %36 = vector.broadcast %35 : vector<8x1xf32> to vector<8x128xf32>
    %37 = arith.mulf %32, %36 : vector<8x128xf32>
    %cst_21 = arith.constant 9.99999993E-9 : f32
    %38 = vector.broadcast %cst_21 : f32 to vector<8x128xf32>
    %39 = arith.addf %37, %38 : vector<8x128xf32>
    %40 = math.log %39 : vector<8x128xf32>
    %41 = arith.mulf %37, %40 : vector<8x128xf32>
    %cst_22 = arith.constant dense<0.000000e+00> : vector<8xf32>
    %42 = vector.multi_reduction <add>, %41, %cst_22 [1] : vector<8x128xf32> to vector<8xf32>
    %43 = vector.shape_cast %42 : vector<8xf32> to vector<8x1xf32>
    %c5_i32_23 = arith.constant 5 : i32
    %44 = vector.broadcast %c5_i32_23 : i32 to vector<8x128xi32>
    %45 = arith.cmpi eq, %23, %44 : vector<8x128xi32>
    %cst_24 = arith.constant 0.000000e+00 : f32
    %46 = vector.broadcast %cst_24 : f32 to vector<8x128xf32>
    %47 = arith.select %45, %22, %46 : vector<8x128xi1>, vector<8x128xf32>
    %cst_25 = arith.constant dense<0.000000e+00> : vector<8xf32>
    %48 = vector.multi_reduction <add>, %47, %cst_25 [1] : vector<8x128xf32> to vector<8xf32>
    %49 = vector.shape_cast %48 : vector<8xf32> to vector<8x1xf32>
    %c5_i32_26 = arith.constant 5 : i32
    %50 = vector.broadcast %c5_i32_26 : i32 to vector<8x128xi32>
    %51 = arith.cmpi eq, %23, %50 : vector<8x128xi32>
    %c6_i32 = arith.constant 6 : i32
    %52 = vector.broadcast %c6_i32 : i32 to vector<8x128xi32>
    %53 = arith.cmpi eq, %23, %52 : vector<8x128xi32>
    %cst_27 = arith.constant 0.000000e+00 : f32
    %54 = vector.shape_cast %43 : vector<8x1xf32> to vector<8x1xf32>
    %55 = vector.broadcast %54 : vector<8x1xf32> to vector<8x128xf32>
    %56 = vector.broadcast %cst_27 : f32 to vector<8x128xf32>
    %57 = arith.select %53, %55, %56 : vector<8x128xi1>, vector<8x128xf32>
    %58 = vector.shape_cast %49 : vector<8x1xf32> to vector<8x1xf32>
    %59 = vector.broadcast %58 : vector<8x1xf32> to vector<8x128xf32>
    %60 = arith.select %51, %59, %57 : vector<8x128xi1>, vector<8x128xf32>
    %61 = arith.select %25, %37, %60 : vector<8x128xi1>, vector<8x128xf32>
    %c0_28 = arith.constant 0 : index
    %c0_29 = arith.constant 0 : index
    %62 = vector.load %arg4[%c0_28, %c0_29] : memref<8x128xf32, #tpu.memory_space<vmem>>, vector<8x128xf32>
    tpu.vector_store %arg4[%c0_28, %c0_29], %61 {strides = array<i32>} : memref<8x128xf32, #tpu.memory_space<vmem>>, vector<8x128xf32>,
    return
  }
  func.func @transform_0(%arg0: i32) -> (i32, i32) {
    %c0_i32 = arith.constant 0 : i32
    %c0_i32_0 = arith.constant 0 : i32
    return %arg0, %c0_i32 : i32, i32
  }
  func.func @transform_1(%arg0: i32) -> (i32, i32, i32) {
    %c0_i32 = arith.constant 0 : i32
    %c0_i32_0 = arith.constant 0 : i32
    %c0_i32_1 = arith.constant 0 : i32
    %c0_i32_2 = arith.constant 0 : i32
    return %c0_i32, %c0_i32_0, %c0_i32_1 : i32, i32, i32
  }
  func.func @transform_2(%arg0: i32) -> (i32, i32) {
    %c0_i32 = arith.constant 0 : i32
    %c0_i32_0 = arith.constant 0 : i32
    %c0_i32_1 = arith.constant 0 : i32
    return %c0_i32, %c0_i32_0 : i32, i32
  }
  func.func @transform_3(%arg0: i32) -> (i32, i32) {
    %c0_i32 = arith.constant 0 : i32
    %c0_i32_0 = arith.constant 0 : i32
    return %arg0, %c0_i32 : i32, i32
  }
}

</mosaic_0001>

<llo_original>
// kernel: single_forward.1
$region0: #{single_forward.1}
  #allocation0 [shape = 'u32[]', space=smem, size = 0x4, offset = 0x4, fixed_abs, tag = 'smem constant byte address 0x4 - core index']
  #allocation1 [shape = 'u32[72,128]{1,0:T(1,128)}', space=vmem, size = 0x9000, scoped, tag = 'internal scratch']
  %s0 = inlined_call_operand.vmem [shape: f32[8,128], index: 0, kind: input, shape index: {}]
  %s1 = inlined_call_operand.hbm [shape: f32[3,128,128], index: 1, kind: input, shape index: {}]
  %s2 = inlined_call_operand.vmem [shape: f32[8,128], index: 2, kind: input, shape index: {}]
  %s3 = inlined_call_operand.vmem [shape: f32[8,128], index: 3, kind: output, shape index: {}]
  %s4 = sld [smem:[#allocation0]]
  $region26: #{single_forward.1} parent=0
    _
  %s6 = ssub.s32 1, %s4
  %s7 = scalar_select 0, %s6, %s4
  $region1: #{single_forward.1} parent=0
    #allocation2 [shape = 'u8[196608]{0}', space=vmem, size = 0x30000, scoped, tag = 'input window, operand 1, single buffered']
    #allocation3 [shape = 's32[1]{0}', space=sflag, size = 0x4, scoped, tag = 'scoped memory for single_forward.1']
    %8 = vsyncpa [#allocation3], 0
    // Predicated region
    $region2: #{single_forward.1} parent=1 // pred_check
      _
    $region3: #{single_forward.1} parent=1 // pred_check_branch
      %10 = sbr.rel (0) target = $region5
    $region4: #{single_forward.1} parent=1 // pred_region
      _
    $region5: #{single_forward.1} parent=1 // pred_fallthru
      _
    // Predicated region
    $region6: #{single_forward.1} parent=1 // pred_check
      _
    $region7: #{single_forward.1} parent=1 // pred_check_branch
      %12 = sbr.rel (0) target = $region9
    $region8: #{single_forward.1} parent=1 // pred_region
      %14 = vsyncadd [#allocation3], 0
      %s15 = sshll.u32 %s1, 4
      %s16 = int_to_ptr.hbm [resolvable:$true] %s15
      %s17 = sshll.u32 [#allocation2], 4
      %s18 = int_to_ptr.vmem [resolvable:$true] %s17
      %23 = dma.hbm_to_vmem [thread:$0]  %s16, 6144, %s18, [#allocation3], 128, 128, 8
    $region9: #{single_forward.1} parent=1 // pred_fallthru
      _
    // Predicated region
    $region10: #{single_forward.1} parent=1 // pred_check
      _
    $region11: #{single_forward.1} parent=1 // pred_check_branch
      %25 = sbr.rel (0) target = $region13
    $region12: #{single_forward.1} parent=1 // pred_region
      _
    $region13: #{single_forward.1} parent=1 // pred_fallthru
      _
    // Predicated region
    $region14: #{single_forward.1} parent=1 // pred_check
      _
    $region15: #{single_forward.1} parent=1 // pred_check_branch
      %27 = sbr.rel (0) target = $region17
    $region16: #{single_forward.1} parent=1 // pred_region
      %29 = dma.done [#allocation3], 6144
    $region17: #{single_forward.1} parent=1 // pred_fallthru
      _
    %v30 = vld [vmem:[%s0] sm:$0xff]
    %v31 = vld [vmem:[#allocation2] sm:$0xff]
    %v32 = vld [vmem:[#allocation2 + $0x8] sm:$0xff]
    %v33 = vld [vmem:[#allocation2 + $0x10] sm:$0xff]
    %v34 = vld [vmem:[#allocation2 + $0x18] sm:$0xff]
    %v35 = vld [vmem:[#allocation2 + $0x20] sm:$0xff]
    %v36 = vld [vmem:[#allocation2 + $0x28] sm:$0xff]
    %v37 = vld [vmem:[#allocation2 + $0x30] sm:$0xff]
    %v38 = vld [vmem:[#allocation2 + $0x38] sm:$0xff]
    %v39 = vld [vmem:[#allocation2 + $0x40] sm:$0xff]
    %v40 = vld [vmem:[#allocation2 + $0x48] sm:$0xff]
    %v41 = vld [vmem:[#allocation2 + $0x50] sm:$0xff]
    %v42 = vld [vmem:[#allocation2 + $0x58] sm:$0xff]
    %v43 = vld [vmem:[#allocation2 + $0x60] sm:$0xff]
    %v44 = vld [vmem:[#allocation2 + $0x68] sm:$0xff]
    %v45 = vld [vmem:[#allocation2 + $0x70] sm:$0xff]
    %v46 = vld [vmem:[#allocation2 + $0x78] sm:$0xff]
    %v47 = vld [vmem:[%s2] sm:$0x1]
    %v48 = vperm.slane %v47, 0
    %49 = vmatpush.msra.mxu0 %v46
    %50 = vmatpush.msra.mxu0 %v45
    %51 = vmatpush.msra.mxu0 %v44
    %52 = vmatpush.msra.mxu0 %v43
    %53 = vmatpush.msra.mxu0 %v42
    %54 = vmatpush.msra.mxu0 %v41
    %55 = vmatpush.msra.mxu0 %v40
    %56 = vmatpush.msra.mxu0 %v39
    %57 = vmatpush.msra.mxu0 %v38
    %58 = vmatpush.msra.mxu0 %v37
    %59 = vmatpush.msra.mxu0 %v36
    %60 = vmatpush.msra.mxu0 %v35
    %61 = vmatpush.msra.mxu0 %v34
    %62 = vmatpush.msra.mxu0 %v33
    %63 = vmatpush.msra.mxu0 %v32
    %64 = vmatpush.msra.mxu0 %v31
    %65 = vmatmul.f32.gmra.mxu0 %v30
    %v66 = vpop.f32.mrf.mxu0
    %v67 = vadd.f32 %v48, %v66
    %68 = vdwg.mxu0
    %v69 = vmax.f32 %v67, 0.0
    %s70 = scalar_lea.vmem [#allocation2], 128
    %v71 = vld [vmem:[%s70] sm:$0xff]
    %v72 = vld [vmem:[%s70 + $0x8] sm:$0xff]
    %v73 = vld [vmem:[%s70 + $0x10] sm:$0xff]
    %v74 = vld [vmem:[%s70 + $0x18] sm:$0xff]
    %v75 = vld [vmem:[%s70 + $0x20] sm:$0xff]
    %v76 = vld [vmem:[%s70 + $0x28] sm:$0xff]
    %v77 = vld [vmem:[%s70 + $0x30] sm:$0xff]
    %v78 = vld [vmem:[%s70 + $0x38] sm:$0xff]
    %v79 = vld [vmem:[%s70 + $0x40] sm:$0xff]
    %v80 = vld [vmem:[%s70 + $0x48] sm:$0xff]
    %v81 = vld [vmem:[%s70 + $0x50] sm:$0xff]
    %v82 = vld [vmem:[%s70 + $0x58] sm:$0xff]
    %v83 = vld [vmem:[%s70 + $0x60] sm:$0xff]
    %v84 = vld [vmem:[%s70 + $0x68] sm:$0xff]
    %v85 = vld [vmem:[%s70 + $0x70] sm:$0xff]
    %v86 = vld [vmem:[%s70 + $0x78] sm:$0xff]
    %v87 = vld [vmem:[%s2 + $0x1] sm:$0x1]
    %v88 = vperm.slane %v87, 0
    %89 = vmatpush.msra.mxu0 %v86
    %90 = vmatpush.msra.mxu0 %v85
    %91 = vmatpush.msra.mxu0 %v84
    %92 = vmatpush.msra.mxu0 %v83
    %93 = vmatpush.msra.mxu0 %v82
    %94 = vmatpush.msra.mxu0 %v81
    %95 = vmatpush.msra.mxu0 %v80
    %96 = vmatpush.msra.mxu0 %v79
    %97 = vmatpush.msra.mxu0 %v78
    %98 = vmatpush.msra.mxu0 %v77
    %99 = vmatpush.msra.mxu0 %v76
    %100 = vmatpush.msra.mxu0 %v75
    %101 = vmatpush.msra.mxu0 %v74
    %102 = vmatpush.msra.mxu0 %v73
    %103 = vmatpush.msra.mxu0 %v72
    %104 = vmatpush.msra.mxu0 %v71
    %105 = vmatmul.f32.gmra.mxu0 %v69
    %v106 = vpop.f32.mrf.mxu0
    %v107 = vadd.f32 %v88, %v106
    %108 = vdwg.mxu0
    %v109 = vmax.f32 %v107, 0.0
    %s110 = scalar_lea.vmem [#allocation2], 256
    %v111 = vld [vmem:[%s110] sm:$0xff]
    %v112 = vld [vmem:[%s110 + $0x8] sm:$0xff]
    %v113 = vld [vmem:[%s110 + $0x10] sm:$0xff]
    %v114 = vld [vmem:[%s110 + $0x18] sm:$0xff]
    %v115 = vld [vmem:[%s110 + $0x20] sm:$0xff]
    %v116 = vld [vmem:[%s110 + $0x28] sm:$0xff]
    %v117 = vld [vmem:[%s110 + $0x30] sm:$0xff]
    %v118 = vld [vmem:[%s110 + $0x38] sm:$0xff]
    %v119 = vld [vmem:[%s110 + $0x40] sm:$0xff]
    %v120 = vld [vmem:[%s110 + $0x48] sm:$0xff]
    %v121 = vld [vmem:[%s110 + $0x50] sm:$0xff]
    %v122 = vld [vmem:[%s110 + $0x58] sm:$0xff]
    %v123 = vld [vmem:[%s110 + $0x60] sm:$0xff]
    %v124 = vld [vmem:[%s110 + $0x68] sm:$0xff]
    %v125 = vld [vmem:[%s110 + $0x70] sm:$0xff]
    %v126 = vld [vmem:[%s110 + $0x78] sm:$0xff]
    %v127 = vld [vmem:[%s2 + $0x2] sm:$0x1]
    %v128 = vperm.slane %v127, 0
    %129 = vmatpush.msra.mxu0 %v126
    %130 = vmatpush.msra.mxu0 %v125
    %131 = vmatpush.msra.mxu0 %v124
    %132 = vmatpush.msra.mxu0 %v123
    %133 = vmatpush.msra.mxu0 %v122
    %134 = vmatpush.msra.mxu0 %v121
    %135 = vmatpush.msra.mxu0 %v120
    %136 = vmatpush.msra.mxu0 %v119
    %137 = vmatpush.msra.mxu0 %v118
    %138 = vmatpush.msra.mxu0 %v117
    %139 = vmatpush.msra.mxu0 %v116
    %140 = vmatpush.msra.mxu0 %v115
    %141 = vmatpush.msra.mxu0 %v114
    %142 = vmatpush.msra.mxu0 %v113
    %143 = vmatpush.msra.mxu0 %v112
    %144 = vmatpush.msra.mxu0 %v111
    %145 = vmatmul.f32.gmra.mxu0 %v109
    %v146 = vpop.f32.mrf.mxu0
    %v147 = vadd.f32 %v128, %v146
    %148 = vdwg.mxu0
    %v149 = vlaneseq
    %v150 = vand.u32 %v149, 127
    %vm151 = vcmp.lt.s32.totalorder %v150, 5
    %v152 = vsel %vm151, %v147, -inf
    %153 = vmax.xlane.f32.xlu0 %v152
    %v154 = vpop.xlane.xlu0 %153
    %v155 = vsub.f32 %v152, %v154
    %v156 = vmul.f32 %v155, 1.442695
    %v157 = vpow.pop %v156
    %158 = vadd.xlane.f32.xlu0 %v157
    %v159 = vpop.xlane.xlu0 %158
    %v160 = vrcp.pop %v159
    %v161 = vmul.f32 %v159, %v160
    %v162 = vsub.f32 1.0, %v161
    %v163 = vmul.f32 %v160, %v162
    %v164 = vadd.f32 %v160, %v163
    %vm165 = vweird.f32 %v159
    %vm166 = vweird.f32 %v160
    %vm167 = vmor %vm165, %vm166
    %v168 = vsel %vm167, %v160, %v164
    %v169 = vand.u32 2147483647, %v159
    %vm170 = vcmp.eq.f32.partialorder %v169, 8.507059e+37
    %v171 = vand.u32 %v159, 2147483648
    %v172 = vor.u32 1.1754944e-38, %v171
    %v173 = vsel %vm170, %v172, %v168
    %v174 = vmul.f32 %v157, %v173
    %v175 = vadd.f32 %v174, 1e-08
    %v176 = vlog2.pop %v175
    %v177 = vmul.f32 %v176, 0.6931472
    %v178 = vmul.f32 %v174, %v177
    %179 = vadd.xlane.f32.xlu0 %v178
    %v180 = vpop.xlane.xlu0 %179
    %vm181 = vcmp.eq.s32.totalorder %v150, 5
    %v182 = vsel %vm181, %v147, 0.0
    %183 = vadd.xlane.f32.xlu0 %v182
    %v184 = vpop.xlane.xlu0 %183
    %vm185 = vcmp.eq.s32.totalorder %v150, 6
    %v186 = vsel %vm185, %v180, 0.0
    %v187 = vsel %vm181, %v184, %v186
    %v188 = vsel %vm151, %v174, %v187
    %189 = vst [vmem:[%s3] sm:$0xff] %v188
    // Predicated region
    $region18: #{single_forward.1} parent=1 // pred_check
      _
    $region19: #{single_forward.1} parent=1 // pred_check_branch
      %191 = sbr.rel (0) target = $region21
    $region20: #{single_forward.1} parent=1 // pred_region
      _
    $region21: #{single_forward.1} parent=1 // pred_fallthru
      _
    // Predicated region
    $region22: #{single_forward.1} parent=1 // pred_check
      _
    $region23: #{single_forward.1} parent=1 // pred_check_branch
      %193 = sbr.rel (0) target = $region25
    $region24: #{single_forward.1} parent=1 // pred_region
      _
    $region25: #{single_forward.1} parent=1 // pred_fallthru
      _
    %194 = vsyncpa [#allocation3], 1

</llo_original>
